<compile_context>
chip_gen: v5e
topology: v5e:2x2
jax: 0.10.0
libtpu: 0.0.40
codegen_flags: <defaults>
</compile_context>

<pallas_src>
import jax
import jax.numpy as jnp
from jax.experimental import pallas as pl
from jax.experimental.pallas import tpu as pltpu

# Deterministic parameter initialization (same values as FSRS3.init_w).
INIT_W = jnp.array(
    [0.9605, 1.7234, 4.8527, -1.1917, -1.2956, 0.0573, 1.7352, -0.1673,
     1.065, 1.8907, -0.3832, 0.5867, 1.0721],
    dtype=jnp.float32,
)

_SUB = 8
_LANE = 128
_VREG_B = _SUB * _LANE          # 1024 batch elements per vreg


def _fsrs3_kernel(p_ref, meta_ref, t_ref, rating_ref, s0_ref, d0_ref,
                  s_out_ref, d_out_ref, s_scr, d_scr):
    seq_tile = t_ref.shape[0]
    sj = pl.program_id(1)

    # Loop-invariant scalars (precomputed in the wrapper, resident in SMEM).
    w0, w1, w2, w3, w4 = p_ref[0], p_ref[1], p_ref[2], p_ref[3], p_ref[4]
    mr_a = p_ref[5]             # w5 * w2        (mean reversion)
    mr_b = p_ref[6]             # 1 - w5
    exp_w6 = p_ref[7]           # exp(w6)
    w7, w8 = p_ref[8], p_ref[9]
    ln_w9 = p_ref[10]           # log(w9)
    w10, w11, w12 = p_ref[11], p_ref[12], p_ref[13]
    ln09 = p_ref[14]            # log(0.9)

    seq_len = meta_ref[0]
    zero_flag = meta_ref[1] != 0        # torch.equal(state, zeros) on the
                                        # *initial* state (only step 0 matters:
                                        # new_s is clipped to >= 0.1 afterwards)
    base = sj * seq_tile
    trip = jnp.minimum(seq_tile, seq_len - base)   # real steps in this block

    def recurrent(t, rating, s, d):
        # Steady-state FSRS3 step (no init branch) on a [K*8, 128] slab.
        rating_m3 = rating - 3.0
        r = jnp.exp(ln09 * t * pl.reciprocal(s, approx=True))   # 0.9 ** (t/s)
        one_m_r = 1.0 - r
        d_new = jnp.clip(mr_a + mr_b * (d + w4 * rating_m3), 1.0, 10.0)
        ln_s = jnp.log(s)
        s_succ = s * (1.0 + exp_w6 * (11.0 - d_new) * jnp.exp(w7 * ln_s)
                      * (jnp.exp(one_m_r * w8) - 1.0))
        # w9 * d^w10 * s^w11 * exp((1-r)*w12), fused into a single exp.
        s_fail = jnp.exp(ln_w9 + w10 * jnp.log(d_new) + w11 * ln_s
                         + one_m_r * w12)
        s_new = jnp.clip(jnp.where(rating > 1.0, s_succ, s_fail), 0.1, 36500.0)
        return s_new, d_new

    # ---- step 0 (first sequence block only): init-state select peeled out ----
    @pl.when(sj == 0)
    def _():
        s0 = s0_ref[...]
        d0 = d0_ref[...]
        t0 = t_ref[0]
        r0 = rating_ref[0]
        s_rec, d_rec = recurrent(t0, r0, s0, d0)
        s_init = jnp.clip(w0 + w1 * (r0 - 1.0), 0.1, 36500.0)
        d_init = jnp.clip(w2 + w3 * (r0 - 3.0), 1.0, 10.0)
        # where() select: NaN/inf from the untaken recurrent branch (s0 == 0
        # when the initial state is all-zero) does not propagate.
        new_s = jnp.where(zero_flag, s_init, s_rec)
        new_d = jnp.where(zero_flag, d_init, d_rec)
        s_out_ref[0] = new_s
        d_out_ref[0] = new_d
        s_scr[...] = new_s
        d_scr[...] = new_d

    # ---- steady-state loop: no init branch, full (K*8,128) slab stores ----
    lo = jnp.where(sj == 0, 1, 0)

    def body(i, carry):
        s, d = carry
        s_new, d_new = recurrent(t_ref[i], rating_ref[i], s, d)
        s_out_ref[i] = s_new
        d_out_ref[i] = d_new
        return s_new, d_new

    s_fin, d_fin = jax.lax.fori_loop(lo, trip, body, (s_scr[...], d_scr[...]))
    # Carry the state into the next sequence block.
    s_scr[...] = s_fin
    d_scr[...] = d_fin


def fsrs3_forward(w, inputs, state=None, *, seq_tile=128):
    """Equivalent of FSRS3.forward.

    inputs: [seq_len, batch, 2] float32
    state:  [batch, 2] float32 or None
    returns (outputs [seq_len, batch, 2], final_state [batch, 2])
    """
    seq_len, batch, _ = inputs.shape
    w = jnp.asarray(w, jnp.float32)
    if state is None:
        state = jnp.zeros((batch, 2), dtype=jnp.float32)
    state = jnp.asarray(state, jnp.float32)

    # Whole-tensor zero check (exactly torch.equal(state, zeros_like(state))),
    # computed once on the unpadded state; only global step 0 can take it.
    flag = jnp.all(state == 0.0)

    # Loop-invariant scalar math hoisted out of the kernel.
    params = jnp.stack([
        w[0], w[1], w[2], w[3], w[4],
        w[5] * w[2],                       # mean reversion: w5*w2
        1.0 - w[5],                        # mean reversion: 1-w5
        jnp.exp(w[6]),
        w[7], w[8],
        jnp.log(w[9]),                     # w9 > 0 (clipper keeps it in [0.5, 5])
        w[10], w[11], w[12],
        jnp.log(jnp.float32(0.9)),
    ]).astype(jnp.float32)
    meta = jnp.concatenate([
        jnp.array([seq_len], dtype=jnp.int32),
        flag.astype(jnp.int32).reshape(1),
    ])

    # ---- batch tiling: K stacked vregs per block, lane-dense (K*8, 128) ----
    n1 = -(-batch // _VREG_B)              # number of 1024-wide vreg tiles
    if n1 <= 1:
        k = 1
    elif n1 < 8:
        k = max(1, n1 // 2)                # keep >= 2 batch blocks (v7x 2 TCs)
    else:
        k = 4                              # cap K: ~10-14 live vregs per chain
    rows = k * _SUB
    nb = -(-n1 // k)
    b_pad = nb * rows * _LANE

    # ---- sequence tiling: balanced block size, ragged tail handled in-kernel
    st = max(1, min(int(seq_tile), seq_len))
    ns = -(-seq_len // st)
    st = -(-seq_len // ns)                 # balance blocks across the grid
    s_pad = ns * st

    # Channel-major pre-transpose: one pad, no strided per-channel slices.
    x = jnp.moveaxis(jnp.asarray(inputs, jnp.float32), 2, 0)   # [2, seq, batch]
    x = jnp.pad(x, ((0, 0), (0, s_pad - seq_len), (0, b_pad - batch)),
                constant_values=1.0)
    x = x.reshape(2, s_pad, nb, rows, _LANE)
    t_p = x[0]
    r_p = x[1]

    # Pad the state with 1.0 so padded lanes never log/recip zero (their values
    # are dropped; real lanes are untouched since everything is elementwise).
    s0 = jnp.pad(state[:, 0], (0, b_pad - batch), constant_values=1.0)
    d0 = jnp.pad(state[:, 1], (0, b_pad - batch), constant_values=1.0)
    s0 = s0.reshape(nb, rows, _LANE)
    d0 = d0.reshape(nb, rows, _LANE)

    seq_spec = pl.BlockSpec((st, None, rows, _LANE), lambda b, s: (s, b, 0, 0))
    state_spec = pl.BlockSpec((None, rows, _LANE), lambda b, s: (b, 0, 0))
    smem_spec = pl.BlockSpec(memory_space=pltpu.MemorySpace.SMEM)

    s_out, d_out = pl.pallas_call(
        _fsrs3_kernel,
        grid=(nb, ns),
        out_shape=(
            jax.ShapeDtypeStruct((s_pad, nb, rows, _LANE), jnp.float32),
            jax.ShapeDtypeStruct((s_pad, nb, rows, _LANE), jnp.float32),
        ),
        in_specs=[
            smem_spec,     # params (15,) f32
            smem_spec,     # meta (2,) i32: [seq_len, zero-state flag]
            seq_spec,      # elapsed time t
            seq_spec,      # rating
            state_spec,    # initial stability
            state_spec,    # initial difficulty
        ],
        out_specs=(seq_spec, seq_spec),
        scratch_shapes=[
            pltpu.VMEM((rows, _LANE), jnp.float32),   # carried stability
            pltpu.VMEM((rows, _LANE), jnp.float32),   # carried difficulty
        ],
        compiler_params=pltpu.CompilerParams(
            dimension_semantics=("parallel", "arbitrary"),
            vmem_limit_bytes=32 * 1024 * 1024,
        ),
    )(params, meta, t_p, r_p, s0, d0)

    s_out = s_out.reshape(s_pad, b_pad)[:seq_len, :batch]
    d_out = d_out.reshape(s_pad, b_pad)[:seq_len, :batch]
    # TODO(synk): the final stack to [seq, batch, 2] is one extra HBM pass kept
    # only to match the PyTorch return layout.
    outputs = jnp.stack([s_out, d_out], axis=2)      # [seq, batch, 2]
    final_state = outputs[-1]                        # [batch, 2]
    return outputs, final_state


if __name__ == "__main__":
    key = jax.random.PRNGKey(0)
    k_t, k_r = jax.random.split(key)

    seq_len, batch = 8, 8
    # elapsed time in days (non-negative), rating in {1, 2, 3, 4}
    elapsed = jax.random.uniform(k_t, (seq_len, batch), jnp.float32, 0.0, 10.0)
    rating = jax.random.randint(k_r, (seq_len, batch), 1, 5).astype(jnp.float32)
    inputs = jnp.stack([elapsed, rating], axis=2)    # [seq_len, batch, 2]

    # Default call: zero initial state (init branch taken at step 0).
    outputs, final_state = fsrs3_forward(INIT_W, inputs)
    jax.block_until_ready((outputs, final_state))
    assert outputs.shape == (seq_len, batch, 2)
    assert final_state.shape == (batch, 2)

    # Second call with a provided non-zero state (pure recurrent path).
    outputs2, final_state2 = fsrs3_forward(INIT_W, inputs, state=final_state)
    jax.block_until_ready((outputs2, final_state2))
    assert outputs2.shape == (seq_len, batch, 2)
    assert final_state2.shape == (batch, 2)

    print("KERNEL_OK")
</pallas_src>

<mosaic_0001>
module attributes {stable_mosaic.version = 11 : i64} {
  func.func @_fsrs3_kernel(%arg0: i32, %arg1: i32, %arg2: memref<15xf32, #tpu.memory_space<smem>>, %arg3: memref<2xi32, #tpu.memory_space<smem>>, %arg4: memref<8x1x8x128xf32, #tpu.memory_space<vmem>>, %arg5: memref<8x1x8x128xf32, #tpu.memory_space<vmem>>, %arg6: memref<1x8x128xf32, #tpu.memory_space<vmem>>, %arg7: memref<1x8x128xf32, #tpu.memory_space<vmem>>, %arg8: memref<8x1x8x128xf32, #tpu.memory_space<vmem>>, %arg9: memref<8x1x8x128xf32, #tpu.memory_space<vmem>>, %arg10: memref<8x128xf32, #tpu.memory_space<vmem>>, %arg11: memref<8x128xf32, #tpu.memory_space<vmem>>) attributes {dimension_semantics = [#tpu.dimension_semantics<parallel>, #tpu.dimension_semantics<arbitrary>], iteration_bounds = array<i64: 1, 1>, scalar_prefetch = 0 : i64, scratch_operands = 2 : i64, tpu.core_type = #tpu.core_type<tc>, window_params = [{transform_indices = @transform_0, window_bounds = array<i64: 15>}, {transform_indices = @transform_1, window_bounds = array<i64: 2>}, {transform_indices = @transform_2, window_bounds = array<i64: 8, 1, 8, 128>}, {transform_indices = @transform_3, window_bounds = array<i64: 8, 1, 8, 128>}, {transform_indices = @transform_4, window_bounds = array<i64: 1, 8, 128>}, {transform_indices = @transform_5, window_bounds = array<i64: 1, 8, 128>}, {transform_indices = @transform_6, window_bounds = array<i64: 8, 1, 8, 128>}, {transform_indices = @transform_7, window_bounds = array<i64: 8, 1, 8, 128>}]} {
    %c0 = arith.constant 0 : index
    %0 = memref.load %arg2[%c0] : memref<15xf32, #tpu.memory_space<smem>>
    %c1 = arith.constant 1 : index
    %1 = memref.load %arg2[%c1] : memref<15xf32, #tpu.memory_space<smem>>
    %c2 = arith.constant 2 : index
    %2 = memref.load %arg2[%c2] : memref<15xf32, #tpu.memory_space<smem>>
    %c3 = arith.constant 3 : index
    %3 = memref.load %arg2[%c3] : memref<15xf32, #tpu.memory_space<smem>>
    %c4 = arith.constant 4 : index
    %4 = memref.load %arg2[%c4] : memref<15xf32, #tpu.memory_space<smem>>
    %c5 = arith.constant 5 : index
    %5 = memref.load %arg2[%c5] : memref<15xf32, #tpu.memory_space<smem>>
    %c6 = arith.constant 6 : index
    %6 = memref.load %arg2[%c6] : memref<15xf32, #tpu.memory_space<smem>>
    %c7 = arith.constant 7 : index
    %7 = memref.load %arg2[%c7] : memref<15xf32, #tpu.memory_space<smem>>
    %c8 = arith.constant 8 : index
    %8 = memref.load %arg2[%c8] : memref<15xf32, #tpu.memory_space<smem>>
    %c9 = arith.constant 9 : index
    %9 = memref.load %arg2[%c9] : memref<15xf32, #tpu.memory_space<smem>>
    %c10 = arith.constant 10 : index
    %10 = memref.load %arg2[%c10] : memref<15xf32, #tpu.memory_space<smem>>
    %c11 = arith.constant 11 : index
    %11 = memref.load %arg2[%c11] : memref<15xf32, #tpu.memory_space<smem>>
    %c12 = arith.constant 12 : index
    %12 = memref.load %arg2[%c12] : memref<15xf32, #tpu.memory_space<smem>>
    %c13 = arith.constant 13 : index
    %13 = memref.load %arg2[%c13] : memref<15xf32, #tpu.memory_space<smem>>
    %c14 = arith.constant 14 : index
    %14 = memref.load %arg2[%c14] : memref<15xf32, #tpu.memory_space<smem>>
    %c0_0 = arith.constant 0 : index
    %15 = memref.load %arg3[%c0_0] : memref<2xi32, #tpu.memory_space<smem>>
    %c1_1 = arith.constant 1 : index
    %16 = memref.load %arg3[%c1_1] : memref<2xi32, #tpu.memory_space<smem>>
    %c0_i32 = arith.constant 0 : i32
    %17 = arith.cmpi ne, %16, %c0_i32 : i32
    %c8_i32 = arith.constant 8 : i32
    %18 = arith.muli %arg1, %c8_i32 : i32
    %19 = arith.subi %15, %18 : i32
    %c8_i32_2 = arith.constant 8 : i32
    %20 = arith.minsi %c8_i32_2, %19 : i32
    %c0_i32_3 = arith.constant 0 : i32
    %21 = arith.cmpi eq, %arg1, %c0_i32_3 : i32
    %22 = arith.extui %21 : i1 to i32
    %c0_i32_4 = arith.constant 0 : i32
    %23 = arith.cmpi ne, %22, %c0_i32_4 : i32
    scf.if %23 {
      %c0_16 = arith.constant 0 : index
      %c0_17 = arith.constant 0 : index
      %c0_18 = arith.constant 0 : index
      %33 = vector.load %arg6[%c0_16, %c0_17, %c0_18] : memref<1x8x128xf32, #tpu.memory_space<vmem>>, vector<1x8x128xf32>
      %34 = vector.shape_cast %33 : vector<1x8x128xf32> to vector<8x128xf32>
      %c0_19 = arith.constant 0 : index
      %c0_20 = arith.constant 0 : index
      %c0_21 = arith.constant 0 : index
      %35 = vector.load %arg7[%c0_19, %c0_20, %c0_21] : memref<1x8x128xf32, #tpu.memory_space<vmem>>, vector<1x8x128xf32>
      %36 = vector.shape_cast %35 : vector<1x8x128xf32> to vector<8x128xf32>
      %c0_22 = arith.constant 0 : index
      %c0_23 = arith.constant 0 : index
      %c0_24 = arith.constant 0 : index
      %c0_25 = arith.constant 0 : index
      %37 = vector.load %arg4[%c0_22, %c0_23, %c0_24, %c0_25] : memref<8x1x8x128xf32, #tpu.memory_space<vmem>>, vector<1x1x8x128xf32>
      %38 = vector.shape_cast %37 : vector<1x1x8x128xf32> to vector<8x128xf32>
      %c0_26 = arith.constant 0 : index
      %c0_27 = arith.constant 0 : index
      %c0_28 = arith.constant 0 : index
      %c0_29 = arith.constant 0 : index
      %39 = vector.load %arg5[%c0_26, %c0_27, %c0_28, %c0_29] : memref<8x1x8x128xf32, #tpu.memory_space<vmem>>, vector<1x1x8x128xf32>
      %40 = vector.shape_cast %39 : vector<1x1x8x128xf32> to vector<8x128xf32>
      %cst = arith.constant 3.000000e+00 : f32
      %41 = vector.broadcast %cst : f32 to vector<8x128xf32>
      %42 = arith.subf %40, %41 : vector<8x128xf32>
      %43 = vector.broadcast %14 : f32 to vector<8x128xf32>
      %44 = arith.mulf %43, %38 : vector<8x128xf32>
      %45 = tpu.reciprocal %34 {approx = true} : vector<8x128xf32> -> vector<8x128xf32>
      %46 = arith.mulf %44, %45 : vector<8x128xf32>
      %47 = math.exp %46 : vector<8x128xf32>
      %cst_30 = arith.constant 1.000000e+00 : f32
      %48 = vector.broadcast %cst_30 : f32 to vector<8x128xf32>
      %49 = arith.subf %48, %47 : vector<8x128xf32>
      %50 = vector.broadcast %4 : f32 to vector<8x128xf32>
      %51 = arith.mulf %50, %42 : vector<8x128xf32>
      %52 = arith.addf %36, %51 : vector<8x128xf32>
      %53 = vector.broadcast %6 : f32 to vector<8x128xf32>
      %54 = arith.mulf %53, %52 : vector<8x128xf32>
      %55 = vector.broadcast %5 : f32 to vector<8x128xf32>
      %56 = arith.addf %55, %54 : vector<8x128xf32>
      %cst_31 = arith.constant 1.000000e+00 : f32
      %cst_32 = arith.constant 1.000000e+01 : f32
      %57 = vector.broadcast %cst_31 : f32 to vector<8x128xf32>
      %58 = arith.maximumf %57, %56 : vector<8x128xf32>
      %59 = vector.broadcast %cst_32 : f32 to vector<8x128xf32>
      %60 = arith.minimumf %59, %58 : vector<8x128xf32>
      %61 = math.log %34 : vector<8x128xf32>
      %cst_33 = arith.constant 1.100000e+01 : f32
      %62 = vector.broadcast %cst_33 : f32 to vector<8x128xf32>
      %63 = arith.subf %62, %60 : vector<8x128xf32>
      %64 = vector.broadcast %7 : f32 to vector<8x128xf32>
      %65 = arith.mulf %64, %63 : vector<8x128xf32>
      %66 = vector.broadcast %8 : f32 to vector<8x128xf32>
      %67 = arith.mulf %66, %61 : vector<8x128xf32>
      %68 = math.exp %67 : vector<8x128xf32>
      %69 = arith.mulf %65, %68 : vector<8x128xf32>
      %70 = vector.broadcast %9 : f32 to vector<8x128xf32>
      %71 = arith.mulf %49, %70 : vector<8x128xf32>
      %72 = math.exp %71 : vector<8x128xf32>
      %cst_34 = arith.constant 1.000000e+00 : f32
      %73 = vector.broadcast %cst_34 : f32 to vector<8x128xf32>
      %74 = arith.subf %72, %73 : vector<8x128xf32>
      %75 = arith.mulf %69, %74 : vector<8x128xf32>
      %cst_35 = arith.constant 1.000000e+00 : f32
      %76 = vector.broadcast %cst_35 : f32 to vector<8x128xf32>
      %77 = arith.addf %76, %75 : vector<8x128xf32>
      %78 = arith.mulf %34, %77 : vector<8x128xf32>
      %79 = math.log %60 : vector<8x128xf32>
      %80 = vector.broadcast %11 : f32 to vector<8x128xf32>
      %81 = arith.mulf %80, %79 : vector<8x128xf32>
      %82 = vector.broadcast %10 : f32 to vector<8x128xf32>
      %83 = arith.addf %82, %81 : vector<8x128xf32>
      %84 = vector.broadcast %12 : f32 to vector<8x128xf32>
      %85 = arith.mulf %84, %61 : vector<8x128xf32>
      %86 = arith.addf %83, %85 : vector<8x128xf32>
      %87 = vector.broadcast %13 : f32 to vector<8x128xf32>
      %88 = arith.mulf %49, %87 : vector<8x128xf32>
      %89 = arith.addf %86, %88 : vector<8x128xf32>
      %90 = math.exp %89 : vector<8x128xf32>
      %cst_36 = arith.constant 1.000000e+00 : f32
      %91 = vector.broadcast %cst_36 : f32 to vector<8x128xf32>
      %92 = arith.cmpf ogt, %40, %91 : vector<8x128xf32>
      %93 = arith.select %92, %78, %90 : vector<8x128xi1>, vector<8x128xf32>
      %cst_37 = arith.constant 1.000000e-01 : f32
      %cst_38 = arith.constant 3.650000e+04 : f32
      %94 = vector.broadcast %cst_37 : f32 to vector<8x128xf32>
      %95 = arith.maximumf %94, %93 : vector<8x128xf32>
      %96 = vector.broadcast %cst_38 : f32 to vector<8x128xf32>
      %97 = arith.minimumf %96, %95 : vector<8x128xf32>
      %cst_39 = arith.constant 1.000000e+00 : f32
      %98 = vector.broadcast %cst_39 : f32 to vector<8x128xf32>
      %99 = arith.subf %40, %98 : vector<8x128xf32>
      %100 = vector.broadcast %1 : f32 to vector<8x128xf32>
      %101 = arith.mulf %100, %99 : vector<8x128xf32>
      %102 = vector.broadcast %0 : f32 to vector<8x128xf32>
      %103 = arith.addf %102, %101 : vector<8x128xf32>
      %cst_40 = arith.constant 1.000000e-01 : f32
      %cst_41 = arith.constant 3.650000e+04 : f32
      %104 = vector.broadcast %cst_40 : f32 to vector<8x128xf32>
      %105 = arith.maximumf %104, %103 : vector<8x128xf32>
      %106 = vector.broadcast %cst_41 : f32 to vector<8x128xf32>
      %107 = arith.minimumf %106, %105 : vector<8x128xf32>
      %cst_42 = arith.constant 3.000000e+00 : f32
      %108 = vector.broadcast %cst_42 : f32 to vector<8x128xf32>
      %109 = arith.subf %40, %108 : vector<8x128xf32>
      %110 = vector.broadcast %3 : f32 to vector<8x128xf32>
      %111 = arith.mulf %110, %109 : vector<8x128xf32>
      %112 = vector.broadcast %2 : f32 to vector<8x128xf32>
      %113 = arith.addf %112, %111 : vector<8x128xf32>
      %cst_43 = arith.constant 1.000000e+00 : f32
      %cst_44 = arith.constant 1.000000e+01 : f32
      %114 = vector.broadcast %cst_43 : f32 to vector<8x128xf32>
      %115 = arith.maximumf %114, %113 : vector<8x128xf32>
      %116 = vector.broadcast %cst_44 : f32 to vector<8x128xf32>
      %117 = arith.minimumf %116, %115 : vector<8x128xf32>
      %118 = arith.select %17, %107, %97 : vector<8x128xf32>
      %119 = arith.select %17, %117, %60 : vector<8x128xf32>
      %c0_45 = arith.constant 0 : index
      %c0_46 = arith.constant 0 : index
      %c0_47 = arith.constant 0 : index
      %c0_48 = arith.constant 0 : index
      %120 = vector.load %arg8[%c0_45, %c0_46, %c0_47, %c0_48] : memref<8x1x8x128xf32, #tpu.memory_space<vmem>>, vector<1x1x8x128xf32>
      %121 = vector.shape_cast %120 : vector<1x1x8x128xf32> to vector<8x128xf32>
      %122 = vector.shape_cast %118 : vector<8x128xf32> to vector<1x1x8x128xf32>
      tpu.vector_store %arg8[%c0_45, %c0_46, %c0_47, %c0_48], %122 {strides = array<i32>} : memref<8x1x8x128xf32, #tpu.memory_space<vmem>>, vector<1x1x8x128xf32>,
      %c0_49 = arith.constant 0 : index
      %c0_50 = arith.constant 0 : index
      %c0_51 = arith.constant 0 : index
      %c0_52 = arith.constant 0 : index
      %123 = vector.load %arg9[%c0_49, %c0_50, %c0_51, %c0_52] : memref<8x1x8x128xf32, #tpu.memory_space<vmem>>, vector<1x1x8x128xf32>
      %124 = vector.shape_cast %123 : vector<1x1x8x128xf32> to vector<8x128xf32>
      %125 = vector.shape_cast %119 : vector<8x128xf32> to vector<1x1x8x128xf32>
      tpu.vector_store %arg9[%c0_49, %c0_50, %c0_51, %c0_52], %125 {strides = array<i32>} : memref<8x1x8x128xf32, #tpu.memory_space<vmem>>, vector<1x1x8x128xf32>,
      %c0_53 = arith.constant 0 : index
      %c0_54 = arith.constant 0 : index
      %126 = vector.load %arg10[%c0_53, %c0_54] : memref<8x128xf32, #tpu.memory_space<vmem>>, vector<8x128xf32>
      tpu.vector_store %arg10[%c0_53, %c0_54], %118 {strides = array<i32>} : memref<8x128xf32, #tpu.memory_space<vmem>>, vector<8x128xf32>,
      %c0_55 = arith.constant 0 : index
      %c0_56 = arith.constant 0 : index
      %127 = vector.load %arg11[%c0_55, %c0_56] : memref<8x128xf32, #tpu.memory_space<vmem>>, vector<8x128xf32>
      tpu.vector_store %arg11[%c0_55, %c0_56], %119 {strides = array<i32>} : memref<8x128xf32, #tpu.memory_space<vmem>>, vector<8x128xf32>,
    } else {
    }
    %c0_i32_5 = arith.constant 0 : i32
    %24 = arith.cmpi eq, %arg1, %c0_i32_5 : i32
    %c1_i32 = arith.constant 1 : i32
    %c0_i32_6 = arith.constant 0 : i32
    %25 = arith.select %24, %c1_i32, %c0_i32_6 : i32
    %c0_7 = arith.constant 0 : index
    %c0_8 = arith.constant 0 : index
    %26 = vector.load %arg10[%c0_7, %c0_8] : memref<8x128xf32, #tpu.memory_space<vmem>>, vector<8x128xf32>
    %c0_9 = arith.constant 0 : index
    %c0_10 = arith.constant 0 : index
    %27 = vector.load %arg11[%c0_9, %c0_10] : memref<8x128xf32, #tpu.memory_space<vmem>>, vector<8x128xf32>
    %28 = arith.subi %20, %25 : i32
    %29 = arith.addi %25, %28 : i32
    %c1_i32_11 = arith.constant 1 : i32
    %30:2 = scf.for %arg12 = %25 to %29 step %c1_i32_11 iter_args(%arg13 = %26, %arg14 = %27) -> (vector<8x128xf32>, vector<8x128xf32>)  : i32 {
      %33 = arith.index_cast %arg12 : i32 to index
      %c0_16 = arith.constant 0 : index
      %c0_17 = arith.constant 0 : index
      %c0_18 = arith.constant 0 : index
      %34 = vector.load %arg4[%33, %c0_16, %c0_17, %c0_18] : memref<8x1x8x128xf32, #tpu.memory_space<vmem>>, vector<1x1x8x128xf32>
      %35 = vector.shape_cast %34 : vector<1x1x8x128xf32> to vector<8x128xf32>
      %36 = arith.index_cast %arg12 : i32 to index
      %c0_19 = arith.constant 0 : index
      %c0_20 = arith.constant 0 : index
      %c0_21 = arith.constant 0 : index
      %37 = vector.load %arg5[%36, %c0_19, %c0_20, %c0_21] : memref<8x1x8x128xf32, #tpu.memory_space<vmem>>, vector<1x1x8x128xf32>
      %38 = vector.shape_cast %37 : vector<1x1x8x128xf32> to vector<8x128xf32>
      %cst = arith.constant 3.000000e+00 : f32
      %39 = vector.broadcast %cst : f32 to vector<8x128xf32>
      %40 = arith.subf %38, %39 : vector<8x128xf32>
      %41 = vector.broadcast %14 : f32 to vector<8x128xf32>
      %42 = arith.mulf %41, %35 : vector<8x128xf32>
      %43 = tpu.reciprocal %arg13 {approx = true} : vector<8x128xf32> -> vector<8x128xf32>
      %44 = arith.mulf %42, %43 : vector<8x128xf32>
      %45 = math.exp %44 : vector<8x128xf32>
      %cst_22 = arith.constant 1.000000e+00 : f32
      %46 = vector.broadcast %cst_22 : f32 to vector<8x128xf32>
      %47 = arith.subf %46, %45 : vector<8x128xf32>
      %48 = vector.broadcast %4 : f32 to vector<8x128xf32>
      %49 = arith.mulf %48, %40 : vector<8x128xf32>
      %50 = arith.addf %arg14, %49 : vector<8x128xf32>
      %51 = vector.broadcast %6 : f32 to vector<8x128xf32>
      %52 = arith.mulf %51, %50 : vector<8x128xf32>
      %53 = vector.broadcast %5 : f32 to vector<8x128xf32>
      %54 = arith.addf %53, %52 : vector<8x128xf32>
      %cst_23 = arith.constant 1.000000e+00 : f32
      %cst_24 = arith.constant 1.000000e+01 : f32
      %55 = vector.broadcast %cst_23 : f32 to vector<8x128xf32>
      %56 = arith.maximumf %55, %54 : vector<8x128xf32>
      %57 = vector.broadcast %cst_24 : f32 to vector<8x128xf32>
      %58 = arith.minimumf %57, %56 : vector<8x128xf32>
      %59 = math.log %arg13 : vector<8x128xf32>
      %cst_25 = arith.constant 1.100000e+01 : f32
      %60 = vector.broadcast %cst_25 : f32 to vector<8x128xf32>
      %61 = arith.subf %60, %58 : vector<8x128xf32>
      %62 = vector.broadcast %7 : f32 to vector<8x128xf32>
      %63 = arith.mulf %62, %61 : vector<8x128xf32>
      %64 = vector.broadcast %8 : f32 to vector<8x128xf32>
      %65 = arith.mulf %64, %59 : vector<8x128xf32>
      %66 = math.exp %65 : vector<8x128xf32>
      %67 = arith.mulf %63, %66 : vector<8x128xf32>
      %68 = vector.broadcast %9 : f32 to vector<8x128xf32>
      %69 = arith.mulf %47, %68 : vector<8x128xf32>
      %70 = math.exp %69 : vector<8x128xf32>
      %cst_26 = arith.constant 1.000000e+00 : f32
      %71 = vector.broadcast %cst_26 : f32 to vector<8x128xf32>
      %72 = arith.subf %70, %71 : vector<8x128xf32>
      %73 = arith.mulf %67, %72 : vector<8x128xf32>
      %cst_27 = arith.constant 1.000000e+00 : f32
      %74 = vector.broadcast %cst_27 : f32 to vector<8x128xf32>
      %75 = arith.addf %74, %73 : vector<8x128xf32>
      %76 = arith.mulf %arg13, %75 : vector<8x128xf32>
      %77 = math.log %58 : vector<8x128xf32>
      %78 = vector.broadcast %11 : f32 to vector<8x128xf32>
      %79 = arith.mulf %78, %77 : vector<8x128xf32>
      %80 = vector.broadcast %10 : f32 to vector<8x128xf32>
      %81 = arith.addf %80, %79 : vector<8x128xf32>
      %82 = vector.broadcast %12 : f32 to vector<8x128xf32>
      %83 = arith.mulf %82, %59 : vector<8x128xf32>
      %84 = arith.addf %81, %83 : vector<8x128xf32>
      %85 = vector.broadcast %13 : f32 to vector<8x128xf32>
      %86 = arith.mulf %47, %85 : vector<8x128xf32>
      %87 = arith.addf %84, %86 : vector<8x128xf32>
      %88 = math.exp %87 : vector<8x128xf32>
      %cst_28 = arith.constant 1.000000e+00 : f32
      %89 = vector.broadcast %cst_28 : f32 to vector<8x128xf32>
      %90 = arith.cmpf ogt, %38, %89 : vector<8x128xf32>
      %91 = arith.select %90, %76, %88 : vector<8x128xi1>, vector<8x128xf32>
      %cst_29 = arith.constant 1.000000e-01 : f32
      %cst_30 = arith.constant 3.650000e+04 : f32
      %92 = vector.broadcast %cst_29 : f32 to vector<8x128xf32>
      %93 = arith.maximumf %92, %91 : vector<8x128xf32>
      %94 = vector.broadcast %cst_30 : f32 to vector<8x128xf32>
      %95 = arith.minimumf %94, %93 : vector<8x128xf32>
      %96 = arith.index_cast %arg12 : i32 to index
      %c0_31 = arith.constant 0 : index
      %c0_32 = arith.constant 0 : index
      %c0_33 = arith.constant 0 : index
      %97 = vector.load %arg8[%96, %c0_31, %c0_32, %c0_33] : memref<8x1x8x128xf32, #tpu.memory_space<vmem>>, vector<1x1x8x128xf32>
      %98 = vector.shape_cast %97 : vector<1x1x8x128xf32> to vector<8x128xf32>
      %99 = vector.shape_cast %95 : vector<8x128xf32> to vector<1x1x8x128xf32>
      tpu.vector_store %arg8[%96, %c0_31, %c0_32, %c0_33], %99 {strides = array<i32>} : memref<8x1x8x128xf32, #tpu.memory_space<vmem>>, vector<1x1x8x128xf32>,
      %100 = arith.index_cast %arg12 : i32 to index
      %c0_34 = arith.constant 0 : index
      %c0_35 = arith.constant 0 : index
      %c0_36 = arith.constant 0 : index
      %101 = vector.load %arg9[%100, %c0_34, %c0_35, %c0_36] : memref<8x1x8x128xf32, #tpu.memory_space<vmem>>, vector<1x1x8x128xf32>
      %102 = vector.shape_cast %101 : vector<1x1x8x128xf32> to vector<8x128xf32>
      %103 = vector.shape_cast %58 : vector<8x128xf32> to vector<1x1x8x128xf32>
      tpu.vector_store %arg9[%100, %c0_34, %c0_35, %c0_36], %103 {strides = array<i32>} : memref<8x1x8x128xf32, #tpu.memory_space<vmem>>, vector<1x1x8x128xf32>,
      scf.yield %95, %58 : vector<8x128xf32>, vector<8x128xf32>
    }
    %c0_12 = arith.constant 0 : index
    %c0_13 = arith.constant 0 : index
    %31 = vector.load %arg10[%c0_12, %c0_13] : memref<8x128xf32, #tpu.memory_space<vmem>>, vector<8x128xf32>
    tpu.vector_store %arg10[%c0_12, %c0_13], %30#0 {strides = array<i32>} : memref<8x128xf32, #tpu.memory_space<vmem>>, vector<8x128xf32>,
    %c0_14 = arith.constant 0 : index
    %c0_15 = arith.constant 0 : index
    %32 = vector.load %arg11[%c0_14, %c0_15] : memref<8x128xf32, #tpu.memory_space<vmem>>, vector<8x128xf32>
    tpu.vector_store %arg11[%c0_14, %c0_15], %30#1 {strides = array<i32>} : memref<8x128xf32, #tpu.memory_space<vmem>>, vector<8x128xf32>,
    return
  }
  func.func @transform_0(%arg0: i32, %arg1: i32) -> i32 {
    %c0_i32 = arith.constant 0 : i32
    %c0_i32_0 = arith.constant 0 : i32
    return %c0_i32 : i32
  }
  func.func @transform_1(%arg0: i32, %arg1: i32) -> i32 {
    %c0_i32 = arith.constant 0 : i32
    %c0_i32_0 = arith.constant 0 : i32
    return %c0_i32 : i32
  }
  func.func @transform_2(%arg0: i32, %arg1: i32) -> (i32, i32, i32, i32) {
    %c0_i32 = arith.constant 0 : i32
    %c0_i32_0 = arith.constant 0 : i32
    %c0_i32_1 = arith.constant 0 : i32
    return %arg1, %arg0, %c0_i32, %c0_i32_0 : i32, i32, i32, i32
  }
  func.func @transform_3(%arg0: i32, %arg1: i32) -> (i32, i32, i32, i32) {
    %c0_i32 = arith.constant 0 : i32
    %c0_i32_0 = arith.constant 0 : i32
    %c0_i32_1 = arith.constant 0 : i32
    return %arg1, %arg0, %c0_i32, %c0_i32_0 : i32, i32, i32, i32
  }
  func.func @transform_4(%arg0: i32, %arg1: i32) -> (i32, i32, i32) {
    %c0_i32 = arith.constant 0 : i32
    %c0_i32_0 = arith.constant 0 : i32
    %c0_i32_1 = arith.constant 0 : i32
    return %arg0, %c0_i32, %c0_i32_0 : i32, i32, i32
  }
  func.func @transform_5(%arg0: i32, %arg1: i32) -> (i32, i32, i32) {
    %c0_i32 = arith.constant 0 : i32
    %c0_i32_0 = arith.constant 0 : i32
    %c0_i32_1 = arith.constant 0 : i32
    return %arg0, %c0_i32, %c0_i32_0 : i32, i32, i32
  }
  func.func @transform_6(%arg0: i32, %arg1: i32) -> (i32, i32, i32, i32) {
    %c0_i32 = arith.constant 0 : i32
    %c0_i32_0 = arith.constant 0 : i32
    %c0_i32_1 = arith.constant 0 : i32
    return %arg1, %arg0, %c0_i32, %c0_i32_0 : i32, i32, i32, i32
  }
  func.func @transform_7(%arg0: i32, %arg1: i32) -> (i32, i32, i32, i32) {
    %c0_i32 = arith.constant 0 : i32
    %c0_i32_0 = arith.constant 0 : i32
    %c0_i32_1 = arith.constant 0 : i32
    return %arg1, %arg0, %c0_i32, %c0_i32_0 : i32, i32, i32, i32
  }
}

</mosaic_0001>

<llo_original>
// kernel: tpu_custom_call.1
$region0: #{tpu_custom_call.1}
  #allocation0 [shape = 'u32[]', space=smem, size = 0x4, offset = 0x4, fixed_abs, tag = 'smem constant byte address 0x4 - core index']
  #allocation1 [shape = 'u32[72,128]{1,0:T(1,128)}', space=vmem, size = 0x9000, scoped, tag = 'internal scratch']
  #allocation2 [shape = 'f32[8,128]{1,0:T(8,128)}', space=vmem, size = 0x1000, scoped, tag = 'scratch operand']
  #allocation3 [shape = 'f32[8,128]{1,0:T(8,128)}', space=vmem, size = 0x1000, scoped, tag = 'scratch operand']
  %s0 = inlined_call_operand.hbm [shape: f32[15], index: 0, kind: input, shape index: {}]
  %s1 = inlined_call_operand.hbm [shape: s32[2], index: 1, kind: input, shape index: {}]
  %s2 = inlined_call_operand.hbm [shape: f32[8,1,8,128], index: 2, kind: input, shape index: {}]
  %s3 = inlined_call_operand.hbm [shape: f32[8,1,8,128], index: 3, kind: input, shape index: {}]
  %s4 = inlined_call_operand.hbm [shape: f32[1,8,128], index: 4, kind: input, shape index: {}]
  %s5 = inlined_call_operand.hbm [shape: f32[1,8,128], index: 5, kind: input, shape index: {}]
  %s6 = inlined_call_operand.hbm [shape: f32[8,1,8,128], index: 6, kind: output, shape index: {0}]
  %s7 = inlined_call_operand.hbm [shape: f32[8,1,8,128], index: 7, kind: output, shape index: {1}]
  %8 = xla_tuple %s6, %s7
  %s9 = sld [smem:[#allocation0]]
  $region77: #{tpu_custom_call.1} parent=0
    _
  %s11 = ssub.s32 1, %s9
  %s12 = scalar_select 0, %s11, %s9
  $region1: #{tpu_custom_call.1} parent=0
    #allocation4 [shape = 'u8[512]{0}', space=smem, size = 0x200, scoped, tag = 'input window, operand 0, single buffered']
    #allocation5 [shape = 's32[1]{0}', space=sflag, size = 0x4, scoped, tag = 'scoped memory for tpu_custom_call.1']
    #allocation6 [shape = 's32[1]{0}', space=sflag, size = 0x4, scoped, tag = 'scoped memory for tpu_custom_call.1']
    #allocation7 [shape = 's32[1]{0}', space=sflag, size = 0x4, scoped, tag = 'scoped memory for tpu_custom_call.1']
    #allocation8 [shape = 'u8[512]{0}', space=smem, size = 0x200, scoped, tag = 'input window, operand 1, single buffered']
    #allocation9 [shape = 's32[1]{0}', space=sflag, size = 0x4, scoped, tag = 'scoped memory for tpu_custom_call.1']
    #allocation10 [shape = 'u8[32768]{0}', space=vmem, size = 0x8000, scoped, tag = 'input window, operand 2, single buffered']
    #allocation11 [shape = 'u8[32768]{0}', space=vmem, size = 0x8000, scoped, tag = 'input window, operand 3, single buffered']
    #allocation12 [shape = 's32[1]{0}', space=sflag, size = 0x4, scoped, tag = 'scoped memory for tpu_custom_call.1']
    #allocation13 [shape = 'u8[4096]{0}', space=vmem, size = 0x1000, scoped, tag = 'input window, operand 4, single buffered']
    #allocation14 [shape = 'u8[4096]{0}', space=vmem, size = 0x1000, scoped, tag = 'input window, operand 5, single buffered']
    #allocation15 [shape = 's32[1]{0}', space=sflag, size = 0x4, scoped, tag = 'scoped memory for tpu_custom_call.1']
    #allocation16 [shape = 'u8[32768]{0}', space=vmem, size = 0x8000, scoped, tag = 'output window, operand 0, single buffered']
    #allocation17 [shape = 'u8[32768]{0}', space=vmem, size = 0x8000, scoped, tag = 'output window, operand 1, single buffered']
    #allocation18 [shape = 's32[1]{0}', space=sflag, size = 0x4, scoped, tag = 'scoped memory for tpu_custom_call.1']
    %13 = vsyncpa [#allocation7], 0
    %14 = vsyncpa [#allocation9], 0
    %15 = vsyncpa [#allocation5], 0
    %16 = vsyncpa [#allocation12], 0
    %17 = vsyncpa [#allocation15], 0
    %18 = vsyncpa [#allocation6], 0
    %19 = vsyncpa [#allocation18], 0
    // Predicated region
    $region2: #{tpu_custom_call.1} parent=1 // pred_check
      _
    $region3: #{tpu_custom_call.1} parent=1 // pred_check_branch
      %21 = sbr.rel (0) target = $region5
    $region4: #{tpu_custom_call.1} parent=1 // pred_region
      %23 = vsyncadd [#allocation7], 0
      %s25 = sshll.u32 %s0, 4
      %s26 = int_to_ptr.hbm [resolvable:$true] %s25
      %28 = dma.hbm_to_smem %s26, 16, [#allocation4], [#allocation7]
    $region5: #{tpu_custom_call.1} parent=1 // pred_fallthru
      _
    // Predicated region
    $region6: #{tpu_custom_call.1} parent=1 // pred_check
      _
    $region7: #{tpu_custom_call.1} parent=1 // pred_check_branch
      %30 = sbr.rel (0) target = $region9
    $region8: #{tpu_custom_call.1} parent=1 // pred_region
      %32 = vsyncadd [#allocation9], 0
      %s34 = sshll.u32 %s1, 4
      %s35 = int_to_ptr.hbm [resolvable:$true] %s34
      %37 = dma.hbm_to_smem %s35, 16, [#allocation8], [#allocation9]
    $region9: #{tpu_custom_call.1} parent=1 // pred_fallthru
      _
    // Predicated region
    $region10: #{tpu_custom_call.1} parent=1 // pred_check
      _
    $region11: #{tpu_custom_call.1} parent=1 // pred_check_branch
      %39 = sbr.rel (0) target = $region13
    $region12: #{tpu_custom_call.1} parent=1 // pred_region
      %41 = vsyncadd [#allocation5], 0
      %s42 = sshll.u32 %s2, 4
      %s43 = int_to_ptr.hbm [resolvable:$true] %s42
      %s44 = sshll.u32 [#allocation10], 4
      %s45 = int_to_ptr.vmem [resolvable:$true] %s44
      %50 = dma.hbm_to_vmem [thread:$0]  %s43, 1024, %s45, [#allocation5], 128, 128, 8
    $region13: #{tpu_custom_call.1} parent=1 // pred_fallthru
      _
    // Predicated region
    $region14: #{tpu_custom_call.1} parent=1 // pred_check
      _
    $region15: #{tpu_custom_call.1} parent=1 // pred_check_branch
      %52 = sbr.rel (0) target = $region17
    $region16: #{tpu_custom_call.1} parent=1 // pred_region
      %54 = vsyncadd [#allocation12], 0
      %s55 = sshll.u32 %s3, 4
      %s56 = int_to_ptr.hbm [resolvable:$true] %s55
      %s57 = sshll.u32 [#allocation11], 4
      %s58 = int_to_ptr.vmem [resolvable:$true] %s57
      %63 = dma.hbm_to_vmem [thread:$0]  %s56, 1024, %s58, [#allocation12], 128, 128, 8
    $region17: #{tpu_custom_call.1} parent=1 // pred_fallthru
      _
    // Predicated region
    $region18: #{tpu_custom_call.1} parent=1 // pred_check
      _
    $region19: #{tpu_custom_call.1} parent=1 // pred_check_branch
      %65 = sbr.rel (0) target = $region21
    $region20: #{tpu_custom_call.1} parent=1 // pred_region
      %67 = vsyncadd [#allocation12], 0
      %s69 = sshll.u32 %s4, 4
      %s70 = int_to_ptr.hbm [resolvable:$true] %s69
      %s71 = sshll.u32 [#allocation13], 4
      %s72 = int_to_ptr.vmem [resolvable:$true] %s71
      %74 = dma.hbm_to_vmem [thread:$0]  %s70, 128, %s72, [#allocation12]
    $region21: #{tpu_custom_call.1} parent=1 // pred_fallthru
      _
    // Predicated region
    $region22: #{tpu_custom_call.1} parent=1 // pred_check
      _
    $region23: #{tpu_custom_call.1} parent=1 // pred_check_branch
      %76 = sbr.rel (0) target = $region25
    $region24: #{tpu_custom_call.1} parent=1 // pred_region
      %78 = vsyncadd [#allocation15], 0
      %s80 = sshll.u32 %s5, 4
      %s81 = int_to_ptr.hbm [resolvable:$true] %s80
      %s82 = sshll.u32 [#allocation14], 4
      %s83 = int_to_ptr.vmem [resolvable:$true] %s82
      %85 = dma.hbm_to_vmem [thread:$0]  %s81, 128, %s83, [#allocation15]
    $region25: #{tpu_custom_call.1} parent=1 // pred_fallthru
      _
    // Predicated region
    $region26: #{tpu_custom_call.1} parent=1 // pred_check
      _
    $region27: #{tpu_custom_call.1} parent=1 // pred_check_branch
      %87 = sbr.rel (0) target = $region29
    $region28: #{tpu_custom_call.1} parent=1 // pred_region
      %89 = dma.done [#allocation7], 16
    $region29: #{tpu_custom_call.1} parent=1 // pred_fallthru
      _
    // Predicated region
    $region30: #{tpu_custom_call.1} parent=1 // pred_check
      _
    $region31: #{tpu_custom_call.1} parent=1 // pred_check_branch
      %91 = sbr.rel (0) target = $region33
    $region32: #{tpu_custom_call.1} parent=1 // pred_region
      %93 = dma.done [#allocation9], 16
    $region33: #{tpu_custom_call.1} parent=1 // pred_fallthru
      _
    // Predicated region
    $region34: #{tpu_custom_call.1} parent=1 // pred_check
      _
    $region35: #{tpu_custom_call.1} parent=1 // pred_check_branch
      %95 = sbr.rel (0) target = $region37
    $region36: #{tpu_custom_call.1} parent=1 // pred_region
      %97 = dma.done [#allocation5], 1024
    $region37: #{tpu_custom_call.1} parent=1 // pred_fallthru
      _
    // Predicated region
    $region38: #{tpu_custom_call.1} parent=1 // pred_check
      _
    $region39: #{tpu_custom_call.1} parent=1 // pred_check_branch
      %99 = sbr.rel (0) target = $region41
    $region40: #{tpu_custom_call.1} parent=1 // pred_region
      %101 = dma.done [#allocation12], 1024
    $region41: #{tpu_custom_call.1} parent=1 // pred_fallthru
      _
    // Predicated region
    $region42: #{tpu_custom_call.1} parent=1 // pred_check
      _
    $region43: #{tpu_custom_call.1} parent=1 // pred_check_branch
      %103 = sbr.rel (0) target = $region45
    $region44: #{tpu_custom_call.1} parent=1 // pred_region
      %105 = dma.done [#allocation12], 128
    $region45: #{tpu_custom_call.1} parent=1 // pred_fallthru
      _
    // Predicated region
    $region46: #{tpu_custom_call.1} parent=1 // pred_check
      _
    $region47: #{tpu_custom_call.1} parent=1 // pred_check_branch
      %107 = sbr.rel (0) target = $region49
    $region48: #{tpu_custom_call.1} parent=1 // pred_region
      %109 = dma.done [#allocation15], 128
    $region49: #{tpu_custom_call.1} parent=1 // pred_fallthru
      _
    %110 = sfence
    %s111 = sld [smem:[#allocation4]]
    %s112 = sld [smem:[#allocation4 + $0x1]]
    %s113 = sld [smem:[#allocation4 + $0x2]]
    %s114 = sld [smem:[#allocation4 + $0x3]]
    %s115 = sld [smem:[#allocation4 + $0x4]]
    %s116 = sld [smem:[#allocation4 + $0x5]]
    %s117 = sld [smem:[#allocation4 + $0x6]]
    %s118 = sld [smem:[#allocation4 + $0x7]]
    %s119 = sld [smem:[#allocation4 + $0x8]]
    %s120 = sld [smem:[#allocation4 + $0x9]]
    %s121 = sld [smem:[#allocation4 + $0xa]]
    %s122 = sld [smem:[#allocation4 + $0xb]]
    %s123 = sld [smem:[#allocation4 + $0xc]]
    %s124 = sld [smem:[#allocation4 + $0xd]]
    %s125 = sld [smem:[#allocation4 + $0xe]]
    %s126 = sld [smem:[#allocation8]]
    %s127 = sld [smem:[#allocation8 + $0x1]]
    %p128 = scmp.ne.s32.totalorder %s127, 0
    %s129 = smul.u32 0, 8
    %s130 = ssub.s32 %s126, %s129
    %p131 = scmp.lt.s32.totalorder %s130, 8
    %s132 = scalar_select %p131, %s130, 8
    %p133 = scmp.eq.s32.totalorder 0, 0
    // Predicated region
    $region50: #{tpu_custom_call.1} parent=1 // pred_check
      %p134 = pneg %p133
    $region51: #{tpu_custom_call.1} parent=1 // pred_check_branch
      %136 = sbr.rel (%p134) target = $region53
    $region52: #{tpu_custom_call.1} parent=1 // pred_region
      %v137 = vld [vmem:[#allocation13] sm:$0xff]
      %v138 = vld [vmem:[#allocation14] sm:$0xff]
      %v139 = vld [vmem:[#allocation10] sm:$0xff]
      %v140 = vld [vmem:[#allocation11] sm:$0xff]
      %v141 = vsub.f32 %v140, 3.0
      %v142 = vstv %s125
      %v143 = vmul.f32 %v142, %v139
      %v144 = vrcp.pop %v137
      %v145 = vmul.f32 %v143, %v144
      %v146 = vmul.f32 %v145, 1.442695
      %v147 = vpow.pop %v146
      %v148 = vsub.f32 1.0, %v147
      %v149 = vstv %s115
      %v150 = vmul.f32 %v149, %v141
      %v151 = vadd.f32 %v138, %v150
      %v152 = vstv %s117
      %v153 = vmul.f32 %v152, %v151
      %v154 = vstv %s116
      %v155 = vadd.f32 %v154, %v153
      %v156 = vmax.f32 %v155, 1.0
      %v157 = vmin.f32 %v156, 10.0
      %v158 = vlog2.pop %v137
      %v159 = vmul.f32 %v158, 0.6931472
      %v160 = vsub.f32 11.0, %v157
      %v161 = vstv %s118
      %v162 = vmul.f32 %v161, %v160
      %v163 = vstv %s119
      %v164 = vmul.f32 %v163, %v159
      %v165 = vmul.f32 %v164, 1.442695
      %v166 = vpow.pop %v165
      %v167 = vmul.f32 %v162, %v166
      %v168 = vstv %s120
      %v169 = vmul.f32 %v148, %v168
      %v170 = vmul.f32 %v169, 1.442695
      %v171 = vpow.pop %v170
      %v172 = vsub.f32 %v171, 1.0
      %v173 = vmul.f32 %v167, %v172
      %v174 = vadd.f32 %v173, 1.0
      %v175 = vmul.f32 %v137, %v174
      %v176 = vlog2.pop %v157
      %v177 = vmul.f32 %v176, 0.6931472
      %v178 = vstv %s122
      %v179 = vmul.f32 %v178, %v177
      %v180 = vstv %s121
      %v181 = vadd.f32 %v180, %v179
      %v182 = vstv %s123
      %v183 = vmul.f32 %v182, %v159
      %v184 = vadd.f32 %v181, %v183
      %v185 = vstv %s124
      %v186 = vmul.f32 %v148, %v185
      %v187 = vadd.f32 %v184, %v186
      %v188 = vmul.f32 %v187, 1.442695
      %v189 = vpow.pop %v188
      %vm190 = vcmp.gt.f32.partialorder %v140, 1.0
      %v191 = vsel %vm190, %v175, %v189
      %v192 = vmax.f32 %v191, 0.1
      %v193 = vmin.f32 %v192, 36500.0
      %v194 = vsub.f32 %v140, 1.0
      %v195 = vstv %s112
      %v196 = vmul.f32 %v195, %v194
      %v197 = vstv %s111
      %v198 = vadd.f32 %v197, %v196
      %v199 = vmax.f32 %v198, 0.1
      %v200 = vmin.f32 %v199, 36500.0
      %v201 = vstv %s114
      %v202 = vmul.f32 %v201, %v141
      %v203 = vstv %s113
      %v204 = vadd.f32 %v203, %v202
      %v205 = vmax.f32 %v204, 1.0
      %v206 = vmin.f32 %v205, 10.0
      %s207 = scalar_select %p128, 1, 0
      %v208 = vstv %s207
      %vm209 = vcmp.eq.s32.totalorder %v208, 1
      %v210 = vsel %vm209, %v200, %v193
      %v211 = vsel %vm209, %v206, %v157
      %212 = vst [vmem:[#allocation16] sm:$0xff] %v210
      %213 = vst [vmem:[#allocation17] sm:$0xff] %v211
      %214 = vst [vmem:[#allocation2] sm:$0xff] %v210
      %215 = vst [vmem:[#allocation3] sm:$0xff] %v211
    $region53: #{tpu_custom_call.1} parent=1 // pred_fallthru
      _
    %s216 = scalar_select %p133, 1, 0
    %v217 = vld [vmem:[#allocation2] sm:$0xff]
    %v218 = vld [vmem:[#allocation3] sm:$0xff]
    // While loop
    $region54: #{tpu_custom_call.1} parent=1 // loop_pre_header
      _
    $region55: #{tpu_custom_call.1} parent=1 // loop_header
      %s220 = sphi %s216, %s222
      %p221 = scmp.ge.s32.totalorder %s220, %s132
      %v225 = vphi %v217, %v284
      %v226 = vphi %v218, %v248
    $region56: #{tpu_custom_call.1} parent=1 // loop_header_branch
      %224 = sbr.rel (%p221) target = $region60
    $region57: #{tpu_custom_call.1} parent=1 // loop_body
      %s227 = smul.u32 %s220, 8
      %s228 = scalar_lea.vmem [#allocation10], %s227
      %v229 = vld [vmem:[%s228] sm:$0xff]
      %s230 = scalar_lea.vmem [#allocation11], %s227
      %v231 = vld [vmem:[%s230] sm:$0xff]
      %v232 = vsub.f32 %v231, 3.0
      %v233 = vstv %s125
      %v234 = vmul.f32 %v233, %v229
      %v235 = vrcp.pop %v225
      %v236 = vmul.f32 %v234, %v235
      %v237 = vmul.f32 %v236, 1.442695
      %v238 = vpow.pop %v237
      %v239 = vsub.f32 1.0, %v238
      %v240 = vstv %s115
      %v241 = vmul.f32 %v240, %v232
      %v242 = vadd.f32 %v226, %v241
      %v243 = vstv %s117
      %v244 = vmul.f32 %v243, %v242
      %v245 = vstv %s116
      %v246 = vadd.f32 %v245, %v244
      %v247 = vmax.f32 %v246, 1.0
      %v248 = vmin.f32 %v247, 10.0
      %v249 = vlog2.pop %v225
      %v250 = vmul.f32 %v249, 0.6931472
      %v251 = vsub.f32 11.0, %v248
      %v252 = vstv %s118
      %v253 = vmul.f32 %v252, %v251
      %v254 = vstv %s119
      %v255 = vmul.f32 %v254, %v250
      %v256 = vmul.f32 %v255, 1.442695
      %v257 = vpow.pop %v256
      %v258 = vmul.f32 %v253, %v257
      %v259 = vstv %s120
      %v260 = vmul.f32 %v239, %v259
      %v261 = vmul.f32 %v260, 1.442695
      %v262 = vpow.pop %v261
      %v263 = vsub.f32 %v262, 1.0
      %v264 = vmul.f32 %v258, %v263
      %v265 = vadd.f32 %v264, 1.0
      %v266 = vmul.f32 %v225, %v265
      %v267 = vlog2.pop %v248
      %v268 = vmul.f32 %v267, 0.6931472
      %v269 = vstv %s122
      %v270 = vmul.f32 %v269, %v268
      %v271 = vstv %s121
      %v272 = vadd.f32 %v271, %v270
      %v273 = vstv %s123
      %v274 = vmul.f32 %v273, %v250
      %v275 = vadd.f32 %v272, %v274
      %v276 = vstv %s124
      %v277 = vmul.f32 %v239, %v276
      %v278 = vadd.f32 %v275, %v277
      %v279 = vmul.f32 %v278, 1.442695
      %v280 = vpow.pop %v279
      %vm281 = vcmp.gt.f32.partialorder %v231, 1.0
      %v282 = vsel %vm281, %v266, %v280
      %v283 = vmax.f32 %v282, 0.1
      %v284 = vmin.f32 %v283, 36500.0
      %s285 = scalar_lea.vmem [#allocation16], %s227
      %286 = vst [vmem:[%s285] sm:$0xff] %v284
      %s287 = scalar_lea.vmem [#allocation17], %s227
      %288 = vst [vmem:[%s287] sm:$0xff] %v248
    $region58: #{tpu_custom_call.1} parent=1 // loop_footer
      %s222 = sadd.s32 %s220, 1
    $region59: #{tpu_custom_call.1} parent=1 // loop_footer_branch
      %219 = sbr.rel target = $region55
    $region60: #{tpu_custom_call.1} parent=1 // loop_exit
      _
    %289 = vst [vmem:[#allocation2] sm:$0xff] %v225
    %290 = vst [vmem:[#allocation3] sm:$0xff] %v226
    // Predicated region
    $region61: #{tpu_custom_call.1} parent=1 // pred_check
      _
    $region62: #{tpu_custom_call.1} parent=1 // pred_check_branch
      %292 = sbr.rel (0) target = $region64
    $region63: #{tpu_custom_call.1} parent=1 // pred_region
      %294 = vsyncadd [#allocation6], 0
      %s295 = sshll.u32 [#allocation16], 4
      %s296 = int_to_ptr.vmem [resolvable:$true] %s295
      %s297 = sshll.u32 %s6, 4
      %s298 = int_to_ptr.hbm [resolvable:$true] %s297
      %303 = dma.vmem_to_hbm [thread:$0]  %s296, 1024, %s298, [#allocation6], 128, 128, 8
    $region64: #{tpu_custom_call.1} parent=1 // pred_fallthru
      _
    // Predicated region
    $region65: #{tpu_custom_call.1} parent=1 // pred_check
      _
    $region66: #{tpu_custom_call.1} parent=1 // pred_check_branch
      %305 = sbr.rel (0) target = $region68
    $region67: #{tpu_custom_call.1} parent=1 // pred_region
      %307 = vsyncadd [#allocation18], 0
      %s308 = sshll.u32 [#allocation17], 4
      %s309 = int_to_ptr.vmem [resolvable:$true] %s308
      %s310 = sshll.u32 %s7, 4
      %s311 = int_to_ptr.hbm [resolvable:$true] %s310
      %316 = dma.vmem_to_hbm [thread:$0]  %s309, 1024, %s311, [#allocation18], 128, 128, 8
    $region68: #{tpu_custom_call.1} parent=1 // pred_fallthru
      _
    // Predicated region
    $region69: #{tpu_custom_call.1} parent=1 // pred_check
      _
    $region70: #{tpu_custom_call.1} parent=1 // pred_check_branch
      %318 = sbr.rel (0) target = $region72
    $region71: #{tpu_custom_call.1} parent=1 // pred_region
      %320 = dma.done [#allocation6], 1024
    $region72: #{tpu_custom_call.1} parent=1 // pred_fallthru
      _
    // Predicated region
    $region73: #{tpu_custom_call.1} parent=1 // pred_check
      _
    $region74: #{tpu_custom_call.1} parent=1 // pred_check_branch
      %322 = sbr.rel (0) target = $region76
    $region75: #{tpu_custom_call.1} parent=1 // pred_region
      %324 = dma.done [#allocation18], 1024
    $region76: #{tpu_custom_call.1} parent=1 // pred_fallthru
      _
    %325 = vsyncpa [#allocation5], 1
    %326 = vsyncpa [#allocation12], 1
    %327 = vsyncpa [#allocation15], 1
    %328 = vsyncpa [#allocation6], 1
    %329 = vsyncpa [#allocation18], 1
    %330 = vsyncpa [#allocation7], 1
    %331 = vsyncpa [#allocation9], 1

</llo_original>
